<compile_context>
chip_gen: v6e
topology: v6e:2x2x1
jax: 0.10.0
libtpu: 0.0.40
codegen_flags: <defaults>
</compile_context>

<pallas_src>
import functools

import jax
import jax.numpy as jnp
from jax.experimental import pallas as pl
from jax.experimental.pallas import tpu as pltpu

_LANE = 128
_SUBLANE = 8


def _round_up(x, m):
    return ((x + m - 1) // m) * m


def _fc5_kernel(x_ref,
                w1_ref, b1_ref,
                w2_ref, b2_ref,
                w3_ref, b3_ref,
                w4_ref, b4_ref,
                w5_ref, b5_ref,
                o_ref, *, matmul_dtype):
    """One batch tile: relu(relu(relu(relu(x@W1+b1)@W2+b2)@W3+b3)@W4+b4)@W5+b5."""

    def dense(h, w_ref, b_ref, relu):
        # MXU matmul; operands optionally bf16, accumulation always f32.
        y = jnp.dot(h.astype(matmul_dtype), w_ref[...].astype(matmul_dtype),
                    preferred_element_type=jnp.float32)
        y = y + b_ref[...]            # bias is [1, D], broadcasts over batch rows
        if relu:
            y = jnp.maximum(y, 0.0)
        return y

    h = x_ref[...]
    h = dense(h, w1_ref, b1_ref, relu=True)
    h = dense(h, w2_ref, b2_ref, relu=True)
    h = dense(h, w3_ref, b3_ref, relu=True)
    h = dense(h, w4_ref, b4_ref, relu=True)
    h = dense(h, w5_ref, b5_ref, relu=False)
    o_ref[...] = h.astype(o_ref.dtype)


def fully_connected_nn(x, params, *, block_b=128, matmul_dtype=jnp.float32):
    """Forward pass of fullyConnectedNN.

    x      : [B, in_dim]
    params : list of 5 (W, b) pairs, W_i: [d_in_i, d_out_i], b_i: [d_out_i]
             (W already transposed relative to PyTorch nn.Linear.weight)
    returns: [B, out_dim]
    """
    assert len(params) == 5, "fullyConnectedNN has exactly 5 Linear layers"
    B, in_dim = x.shape
    dims = [in_dim] + [w.shape[1] for w, _ in params]
    out_dim = dims[-1]

    # --- Lane-dense padding: every feature dim -> multiple of 128 -------------
    pdims = [_round_up(d, _LANE) for d in dims]

    padded_params = []
    for i, (w, b) in enumerate(params):
        w_p = jnp.zeros((pdims[i], pdims[i + 1]), w.dtype)
        w_p = w_p.at[:dims[i], :dims[i + 1]].set(w)
        b_p = jnp.zeros((1, pdims[i + 1]), b.dtype)
        b_p = b_p.at[0, :dims[i + 1]].set(b)
        padded_params += [w_p, b_p]

    # --- Batch tiling ----------------------------------------------------------
    tb = min(block_b, _round_up(B, _SUBLANE))
    tb = _round_up(tb, _SUBLANE)
    b_pad = _round_up(B, tb)
    x_p = jnp.zeros((b_pad, pdims[0]), x.dtype).at[:B, :in_dim].set(x)

    grid = (b_pad // tb,)

    # Weights/biases: constant block index -> DMA'd once, resident across all tiles.
    param_specs = []
    for i in range(5):
        param_specs.append(pl.BlockSpec((pdims[i], pdims[i + 1]), lambda g: (0, 0)))
        param_specs.append(pl.BlockSpec((1, pdims[i + 1]), lambda g: (0, 0)))

    flops = 2 * b_pad * sum(pdims[i] * pdims[i + 1] for i in range(5))
    bytes_accessed = (
        x_p.size * x_p.dtype.itemsize
        + sum(a.size * a.dtype.itemsize for a in padded_params)
        + b_pad * pdims[-1] * x.dtype.itemsize
    )

    out_p = pl.pallas_call(
        functools.partial(_fc5_kernel, matmul_dtype=matmul_dtype),
        out_shape=jax.ShapeDtypeStruct((b_pad, pdims[-1]), x.dtype),
        grid_spec=pltpu.PrefetchScalarGridSpec(
            num_scalar_prefetch=0,
            grid=grid,
            in_specs=[pl.BlockSpec((tb, pdims[0]), lambda g: (g, 0))] + param_specs,
            out_specs=pl.BlockSpec((tb, pdims[-1]), lambda g: (g, 0)),
        ),
        compiler_params=pltpu.CompilerParams(
            # Batch tiles are independent -> "parallel" shards them across v7x's 2 TCs
            # (harmless on the single-TC v5e/v6e).
            dimension_semantics=("parallel",),
        ),
        cost_estimate=pl.CostEstimate(
            flops=flops, transcendentals=0, bytes_accessed=bytes_accessed),
    )(x_p, *padded_params)

    # Strip batch and lane padding.
    return out_p[:B, :out_dim]


def _init_linear(key, d_in, d_out, dtype=jnp.float32):
    """Mimic nn.Linear init: uniform(-1/sqrt(fan_in), 1/sqrt(fan_in)) for W and b."""
    kw, kb = jax.random.split(key)
    bound = 1.0 / jnp.sqrt(jnp.asarray(d_in, dtype))
    w = jax.random.uniform(kw, (d_in, d_out), dtype, -bound, bound)
    b = jax.random.uniform(kb, (d_out,), dtype, -bound, bound)
    return w, b


if __name__ == "__main__":
    # Small shapes consistent with the module: 5 Linear layers, modest dims.
    B, in_dim, h1, h2, h3, h4, out_dim = 10, 32, 64, 48, 40, 24, 10

    key = jax.random.PRNGKey(0)
    kx, k1, k2, k3, k4, k5 = jax.random.split(key, 6)

    x = jax.random.normal(kx, (B, in_dim), dtype=jnp.float32)
    layer_dims = [in_dim, h1, h2, h3, h4, out_dim]
    keys = [k1, k2, k3, k4, k5]
    params = [_init_linear(keys[i], layer_dims[i], layer_dims[i + 1])
              for i in range(5)]

    # --- f32 path (exact) ------------------------------------------------------
    out = fully_connected_nn(x, params)
    jax.block_until_ready(out)

    # Pure-JAX reference (same math as the PyTorch forward).
    def ref_forward(x, params):
        h = x
        for i, (w, b) in enumerate(params):
            h = jnp.dot(h, w, precision=jax.lax.Precision.HIGHEST) + b
            if i < 4:
                h = jnp.maximum(h, 0.0)
        return h

    ref = ref_forward(x, params)
    assert out.shape == (B, out_dim)
    assert jnp.allclose(out, ref, atol=1e-4, rtol=1e-4), (
        f"max abs err {jnp.max(jnp.abs(out - ref))}")

    # --- bf16-operand path (v6e/v7x MXU-friendly), f32 accumulation ------------
    out_bf16 = fully_connected_nn(x, params, matmul_dtype=jnp.bfloat16)
    jax.block_until_ready(out_bf16)
    assert out_bf16.shape == (B, out_dim)
    assert jnp.allclose(out_bf16, ref, atol=0.2, rtol=0.1), (
        f"bf16 max abs err {jnp.max(jnp.abs(out_bf16 - ref))}")

    print("KERNEL_OK")
</pallas_src>

<mosaic_0001>
module attributes {stable_mosaic.version = 11 : i64} {
  func.func @_fc5_kernel(%arg0: i32, %arg1: memref<16x128xf32, #tpu.memory_space<vmem>>, %arg2: memref<128x128xf32, #tpu.memory_space<vmem>>, %arg3: memref<1x128xf32, #tpu.memory_space<vmem>>, %arg4: memref<128x128xf32, #tpu.memory_space<vmem>>, %arg5: memref<1x128xf32, #tpu.memory_space<vmem>>, %arg6: memref<128x128xf32, #tpu.memory_space<vmem>>, %arg7: memref<1x128xf32, #tpu.memory_space<vmem>>, %arg8: memref<128x128xf32, #tpu.memory_space<vmem>>, %arg9: memref<1x128xf32, #tpu.memory_space<vmem>>, %arg10: memref<128x128xf32, #tpu.memory_space<vmem>>, %arg11: memref<1x128xf32, #tpu.memory_space<vmem>>, %arg12: memref<16x128xf32, #tpu.memory_space<vmem>>) attributes {dimension_semantics = [#tpu.dimension_semantics<parallel>], iteration_bounds = array<i64: 1>, scalar_prefetch = 0 : i64, scratch_operands = 0 : i64, tpu.core_type = #tpu.core_type<tc>, window_params = [{transform_indices = @transform_0, window_bounds = array<i64: 16, 128>}, {pipeline_mode = #tpu.pipeline_mode<synchronous>, transform_indices = @transform_1, window_bounds = array<i64: 128, 128>}, {pipeline_mode = #tpu.pipeline_mode<synchronous>, transform_indices = @transform_2, window_bounds = array<i64: 1, 128>}, {pipeline_mode = #tpu.pipeline_mode<synchronous>, transform_indices = @transform_3, window_bounds = array<i64: 128, 128>}, {pipeline_mode = #tpu.pipeline_mode<synchronous>, transform_indices = @transform_4, window_bounds = array<i64: 1, 128>}, {pipeline_mode = #tpu.pipeline_mode<synchronous>, transform_indices = @transform_5, window_bounds = array<i64: 128, 128>}, {pipeline_mode = #tpu.pipeline_mode<synchronous>, transform_indices = @transform_6, window_bounds = array<i64: 1, 128>}, {pipeline_mode = #tpu.pipeline_mode<synchronous>, transform_indices = @transform_7, window_bounds = array<i64: 128, 128>}, {pipeline_mode = #tpu.pipeline_mode<synchronous>, transform_indices = @transform_8, window_bounds = array<i64: 1, 128>}, {pipeline_mode = #tpu.pipeline_mode<synchronous>, transform_indices = @transform_9, window_bounds = array<i64: 128, 128>}, {pipeline_mode = #tpu.pipeline_mode<synchronous>, transform_indices = @transform_10, window_bounds = array<i64: 1, 128>}, {transform_indices = @transform_11, window_bounds = array<i64: 16, 128>}]} {
    %c0 = arith.constant 0 : index
    %c0_0 = arith.constant 0 : index
    %0 = vector.load %arg1[%c0, %c0_0] : memref<16x128xf32, #tpu.memory_space<vmem>>, vector<16x128xf32>
    %c0_1 = arith.constant 0 : index
    %c0_2 = arith.constant 0 : index
    %1 = vector.load %arg2[%c0_1, %c0_2] : memref<128x128xf32, #tpu.memory_space<vmem>>, vector<128x128xf32>
    %cst = arith.constant dense<0.000000e+00> : vector<16x128xf32>
    %2 = tpu.matmul %0, %1, %cst {dimension_numbers = #tpu.dot_dimension_numbers<[1], [0], [0], [1], [0, 0, 1, 1], [], []>} : vector<16x128xf32>, vector<128x128xf32>, vector<16x128xf32> -> vector<16x128xf32>
    %c0_3 = arith.constant 0 : index
    %c0_4 = arith.constant 0 : index
    %3 = vector.load %arg3[%c0_3, %c0_4] : memref<1x128xf32, #tpu.memory_space<vmem>>, vector<1x128xf32>
    %4 = vector.broadcast %3 : vector<1x128xf32> to vector<16x128xf32>
    %5 = arith.addf %2, %4 : vector<16x128xf32>
    %cst_5 = arith.constant 0.000000e+00 : f32
    %6 = vector.broadcast %cst_5 : f32 to vector<16x128xf32>
    %7 = arith.maximumf %5, %6 : vector<16x128xf32>
    %c0_6 = arith.constant 0 : index
    %c0_7 = arith.constant 0 : index
    %8 = vector.load %arg4[%c0_6, %c0_7] : memref<128x128xf32, #tpu.memory_space<vmem>>, vector<128x128xf32>
    %cst_8 = arith.constant dense<0.000000e+00> : vector<16x128xf32>
    %9 = tpu.matmul %7, %8, %cst_8 {dimension_numbers = #tpu.dot_dimension_numbers<[1], [0], [0], [1], [0, 0, 1, 1], [], []>} : vector<16x128xf32>, vector<128x128xf32>, vector<16x128xf32> -> vector<16x128xf32>
    %c0_9 = arith.constant 0 : index
    %c0_10 = arith.constant 0 : index
    %10 = vector.load %arg5[%c0_9, %c0_10] : memref<1x128xf32, #tpu.memory_space<vmem>>, vector<1x128xf32>
    %11 = vector.broadcast %10 : vector<1x128xf32> to vector<16x128xf32>
    %12 = arith.addf %9, %11 : vector<16x128xf32>
    %cst_11 = arith.constant 0.000000e+00 : f32
    %13 = vector.broadcast %cst_11 : f32 to vector<16x128xf32>
    %14 = arith.maximumf %12, %13 : vector<16x128xf32>
    %c0_12 = arith.constant 0 : index
    %c0_13 = arith.constant 0 : index
    %15 = vector.load %arg6[%c0_12, %c0_13] : memref<128x128xf32, #tpu.memory_space<vmem>>, vector<128x128xf32>
    %cst_14 = arith.constant dense<0.000000e+00> : vector<16x128xf32>
    %16 = tpu.matmul %14, %15, %cst_14 {dimension_numbers = #tpu.dot_dimension_numbers<[1], [0], [0], [1], [0, 0, 1, 1], [], []>} : vector<16x128xf32>, vector<128x128xf32>, vector<16x128xf32> -> vector<16x128xf32>
    %c0_15 = arith.constant 0 : index
    %c0_16 = arith.constant 0 : index
    %17 = vector.load %arg7[%c0_15, %c0_16] : memref<1x128xf32, #tpu.memory_space<vmem>>, vector<1x128xf32>
    %18 = vector.broadcast %17 : vector<1x128xf32> to vector<16x128xf32>
    %19 = arith.addf %16, %18 : vector<16x128xf32>
    %cst_17 = arith.constant 0.000000e+00 : f32
    %20 = vector.broadcast %cst_17 : f32 to vector<16x128xf32>
    %21 = arith.maximumf %19, %20 : vector<16x128xf32>
    %c0_18 = arith.constant 0 : index
    %c0_19 = arith.constant 0 : index
    %22 = vector.load %arg8[%c0_18, %c0_19] : memref<128x128xf32, #tpu.memory_space<vmem>>, vector<128x128xf32>
    %cst_20 = arith.constant dense<0.000000e+00> : vector<16x128xf32>
    %23 = tpu.matmul %21, %22, %cst_20 {dimension_numbers = #tpu.dot_dimension_numbers<[1], [0], [0], [1], [0, 0, 1, 1], [], []>} : vector<16x128xf32>, vector<128x128xf32>, vector<16x128xf32> -> vector<16x128xf32>
    %c0_21 = arith.constant 0 : index
    %c0_22 = arith.constant 0 : index
    %24 = vector.load %arg9[%c0_21, %c0_22] : memref<1x128xf32, #tpu.memory_space<vmem>>, vector<1x128xf32>
    %25 = vector.broadcast %24 : vector<1x128xf32> to vector<16x128xf32>
    %26 = arith.addf %23, %25 : vector<16x128xf32>
    %cst_23 = arith.constant 0.000000e+00 : f32
    %27 = vector.broadcast %cst_23 : f32 to vector<16x128xf32>
    %28 = arith.maximumf %26, %27 : vector<16x128xf32>
    %c0_24 = arith.constant 0 : index
    %c0_25 = arith.constant 0 : index
    %29 = vector.load %arg10[%c0_24, %c0_25] : memref<128x128xf32, #tpu.memory_space<vmem>>, vector<128x128xf32>
    %cst_26 = arith.constant dense<0.000000e+00> : vector<16x128xf32>
    %30 = tpu.matmul %28, %29, %cst_26 {dimension_numbers = #tpu.dot_dimension_numbers<[1], [0], [0], [1], [0, 0, 1, 1], [], []>} : vector<16x128xf32>, vector<128x128xf32>, vector<16x128xf32> -> vector<16x128xf32>
    %c0_27 = arith.constant 0 : index
    %c0_28 = arith.constant 0 : index
    %31 = vector.load %arg11[%c0_27, %c0_28] : memref<1x128xf32, #tpu.memory_space<vmem>>, vector<1x128xf32>
    %32 = vector.broadcast %31 : vector<1x128xf32> to vector<16x128xf32>
    %33 = arith.addf %30, %32 : vector<16x128xf32>
    %c0_29 = arith.constant 0 : index
    %c0_30 = arith.constant 0 : index
    %34 = vector.load %arg12[%c0_29, %c0_30] : memref<16x128xf32, #tpu.memory_space<vmem>>, vector<16x128xf32>
    tpu.vector_store %arg12[%c0_29, %c0_30], %33 {strides = array<i32>} : memref<16x128xf32, #tpu.memory_space<vmem>>, vector<16x128xf32>,
    return
  }
  func.func @transform_0(%arg0: i32) -> (i32, i32) {
    %c0_i32 = arith.constant 0 : i32
    %c0_i32_0 = arith.constant 0 : i32
    return %arg0, %c0_i32 : i32, i32
  }
  func.func @transform_1(%arg0: i32) -> (i32, i32) {
    %c0_i32 = arith.constant 0 : i32
    %c0_i32_0 = arith.constant 0 : i32
    %c0_i32_1 = arith.constant 0 : i32
    return %c0_i32, %c0_i32_0 : i32, i32
  }
  func.func @transform_2(%arg0: i32) -> (i32, i32) {
    %c0_i32 = arith.constant 0 : i32
    %c0_i32_0 = arith.constant 0 : i32
    %c0_i32_1 = arith.constant 0 : i32
    return %c0_i32, %c0_i32_0 : i32, i32
  }
  func.func @transform_3(%arg0: i32) -> (i32, i32) {
    %c0_i32 = arith.constant 0 : i32
    %c0_i32_0 = arith.constant 0 : i32
    %c0_i32_1 = arith.constant 0 : i32
    return %c0_i32, %c0_i32_0 : i32, i32
  }
  func.func @transform_4(%arg0: i32) -> (i32, i32) {
    %c0_i32 = arith.constant 0 : i32
    %c0_i32_0 = arith.constant 0 : i32
    %c0_i32_1 = arith.constant 0 : i32
    return %c0_i32, %c0_i32_0 : i32, i32
  }
  func.func @transform_5(%arg0: i32) -> (i32, i32) {
    %c0_i32 = arith.constant 0 : i32
    %c0_i32_0 = arith.constant 0 : i32
    %c0_i32_1 = arith.constant 0 : i32
    return %c0_i32, %c0_i32_0 : i32, i32
  }
  func.func @transform_6(%arg0: i32) -> (i32, i32) {
    %c0_i32 = arith.constant 0 : i32
    %c0_i32_0 = arith.constant 0 : i32
    %c0_i32_1 = arith.constant 0 : i32
    return %c0_i32, %c0_i32_0 : i32, i32
  }
  func.func @transform_7(%arg0: i32) -> (i32, i32) {
    %c0_i32 = arith.constant 0 : i32
    %c0_i32_0 = arith.constant 0 : i32
    %c0_i32_1 = arith.constant 0 : i32
    return %c0_i32, %c0_i32_0 : i32, i32
  }
  func.func @transform_8(%arg0: i32) -> (i32, i32) {
    %c0_i32 = arith.constant 0 : i32
    %c0_i32_0 = arith.constant 0 : i32
    %c0_i32_1 = arith.constant 0 : i32
    return %c0_i32, %c0_i32_0 : i32, i32
  }
  func.func @transform_9(%arg0: i32) -> (i32, i32) {
    %c0_i32 = arith.constant 0 : i32
    %c0_i32_0 = arith.constant 0 : i32
    %c0_i32_1 = arith.constant 0 : i32
    return %c0_i32, %c0_i32_0 : i32, i32
  }
  func.func @transform_10(%arg0: i32) -> (i32, i32) {
    %c0_i32 = arith.constant 0 : i32
    %c0_i32_0 = arith.constant 0 : i32
    %c0_i32_1 = arith.constant 0 : i32
    return %c0_i32, %c0_i32_0 : i32, i32
  }
  func.func @transform_11(%arg0: i32) -> (i32, i32) {
    %c0_i32 = arith.constant 0 : i32
    %c0_i32_0 = arith.constant 0 : i32
    return %arg0, %c0_i32 : i32, i32
  }
}

</mosaic_0001>

<llo_original>
// kernel: tpu_custom_call.1
$region0: #{tpu_custom_call.1}
  #allocation0 [shape = 'u32[]', space=smem, size = 0x4, offset = 0x4, fixed_abs, tag = 'smem constant byte address 0x4 - core index']
  #allocation1 [shape = 'u32[144,128]{1,0:T(1,128)}', space=vmem, size = 0x12000, scoped, tag = 'internal scratch']
  %s0 = inlined_call_operand.hbm [shape: f32[16,128], index: 0, kind: input, shape index: {}]
  %s1 = inlined_call_operand.hbm [shape: f32[128,128], index: 1, kind: input, shape index: {}]
  %s2 = inlined_call_operand.vmem [shape: f32[1,128], index: 2, kind: input, shape index: {}]
  %s3 = inlined_call_operand.hbm [shape: f32[128,128], index: 3, kind: input, shape index: {}]
  %s4 = inlined_call_operand.vmem [shape: f32[1,128], index: 4, kind: input, shape index: {}]
  %s5 = inlined_call_operand.hbm [shape: f32[128,128], index: 5, kind: input, shape index: {}]
  %s6 = inlined_call_operand.vmem [shape: f32[1,128], index: 6, kind: input, shape index: {}]
  %s7 = inlined_call_operand.hbm [shape: f32[128,128], index: 7, kind: input, shape index: {}]
  %s8 = inlined_call_operand.vmem [shape: f32[1,128], index: 8, kind: input, shape index: {}]
  %s9 = inlined_call_operand.hbm [shape: f32[128,128], index: 9, kind: input, shape index: {}]
  %s10 = inlined_call_operand.vmem [shape: f32[1,128], index: 10, kind: input, shape index: {}]
  %s11 = inlined_call_operand.hbm [shape: f32[16,128], index: 11, kind: output, shape index: {}]
  %s12 = sld [smem:[#allocation0]]
  $region78: #{tpu_custom_call.1} parent=0
    _
  %s14 = ssub.s32 1, %s12
  %s15 = scalar_select 0, %s14, %s12
  $region1: #{tpu_custom_call.1} parent=0
    #allocation2 [shape = 'u8[8192]{0}', space=vmem, size = 0x2000, scoped, tag = 'input window, operand 0, single buffered']
    #allocation3 [shape = 's32[1]{0}', space=sflag, size = 0x4, scoped, tag = 'scoped memory for tpu_custom_call.1']
    #allocation4 [shape = 's32[1]{0}', space=sflag, size = 0x4, scoped, tag = 'scoped memory for tpu_custom_call.1']
    #allocation5 [shape = 'u8[65536]{0}', space=vmem, size = 0x10000, scoped, tag = 'input window, operand 1, single buffered']
    #allocation6 [shape = 's32[1]{0}', space=sflag, size = 0x4, scoped, tag = 'scoped memory for tpu_custom_call.1']
    #allocation7 [shape = 'u8[65536]{0}', space=vmem, size = 0x10000, scoped, tag = 'input window, operand 3, single buffered']
    #allocation8 [shape = 'u8[65536]{0}', space=vmem, size = 0x10000, scoped, tag = 'input window, operand 5, single buffered']
    #allocation9 [shape = 's32[1]{0}', space=sflag, size = 0x4, scoped, tag = 'scoped memory for tpu_custom_call.1']
    #allocation10 [shape = 'u8[65536]{0}', space=vmem, size = 0x10000, scoped, tag = 'input window, operand 7, single buffered']
    #allocation11 [shape = 'u8[65536]{0}', space=vmem, size = 0x10000, scoped, tag = 'input window, operand 9, single buffered']
    #allocation12 [shape = 's32[1]{0}', space=sflag, size = 0x4, scoped, tag = 'scoped memory for tpu_custom_call.1']
    #allocation13 [shape = 'u8[8192]{0}', space=vmem, size = 0x2000, scoped, tag = 'output window, operand 0, single buffered']
    %16 = vsyncpa [#allocation3], 0
    %17 = vsyncpa [#allocation6], 0
    %18 = vsyncpa [#allocation9], 0
    %19 = vsyncpa [#allocation12], 0
    %20 = vsyncpa [#allocation4], 0
    // Predicated region
    $region2: #{tpu_custom_call.1} parent=1 // pred_check
      _
    $region3: #{tpu_custom_call.1} parent=1 // pred_check_branch
      %22 = sbr.rel (0) target = $region5
    $region4: #{tpu_custom_call.1} parent=1 // pred_region
      %s24 = ssub.s32 256, 256
      %25 = vsyncadd [#allocation3], %s24
      %s26 = sshll.u32 [#allocation2], 4
      %s27 = int_to_ptr.vmem [resolvable:$true] %s26
      %32 = dma.hbm_to_vmem [thread:$0]  %s0, 256, %s27, [#allocation3], 128, 128, 8
    $region5: #{tpu_custom_call.1} parent=1 // pred_fallthru
      _
    // Predicated region
    $region6: #{tpu_custom_call.1} parent=1 // pred_check
      _
    $region7: #{tpu_custom_call.1} parent=1 // pred_check_branch
      %34 = sbr.rel (0) target = $region9
    $region8: #{tpu_custom_call.1} parent=1 // pred_region
      %s36 = ssub.s32 2048, 2048
      %37 = vsyncadd [#allocation6], %s36
      %s38 = sshll.u32 [#allocation5], 4
      %s39 = int_to_ptr.vmem [resolvable:$true] %s38
      %44 = dma.hbm_to_vmem [thread:$0]  %s1, 2048, %s39, [#allocation6], 128, 128, 8
    $region9: #{tpu_custom_call.1} parent=1 // pred_fallthru
      _
    // Predicated region
    $region10: #{tpu_custom_call.1} parent=1 // pred_check
      _
    $region11: #{tpu_custom_call.1} parent=1 // pred_check_branch
      %46 = sbr.rel (0) target = $region13
    $region12: #{tpu_custom_call.1} parent=1 // pred_region
      _
    $region13: #{tpu_custom_call.1} parent=1 // pred_fallthru
      _
    // Predicated region
    $region14: #{tpu_custom_call.1} parent=1 // pred_check
      _
    $region15: #{tpu_custom_call.1} parent=1 // pred_check_branch
      %48 = sbr.rel (0) target = $region17
    $region16: #{tpu_custom_call.1} parent=1 // pred_region
      %s50 = ssub.s32 2048, 2048
      %51 = vsyncadd [#allocation6], %s50
      %s52 = sshll.u32 [#allocation7], 4
      %s53 = int_to_ptr.vmem [resolvable:$true] %s52
      %58 = dma.hbm_to_vmem [thread:$0]  %s3, 2048, %s53, [#allocation6], 128, 128, 8
    $region17: #{tpu_custom_call.1} parent=1 // pred_fallthru
      _
    // Predicated region
    $region18: #{tpu_custom_call.1} parent=1 // pred_check
      _
    $region19: #{tpu_custom_call.1} parent=1 // pred_check_branch
      %60 = sbr.rel (0) target = $region21
    $region20: #{tpu_custom_call.1} parent=1 // pred_region
      _
    $region21: #{tpu_custom_call.1} parent=1 // pred_fallthru
      _
    // Predicated region
    $region22: #{tpu_custom_call.1} parent=1 // pred_check
      _
    $region23: #{tpu_custom_call.1} parent=1 // pred_check_branch
      %62 = sbr.rel (0) target = $region25
    $region24: #{tpu_custom_call.1} parent=1 // pred_region
      %s64 = ssub.s32 2048, 2048
      %65 = vsyncadd [#allocation9], %s64
      %s66 = sshll.u32 [#allocation8], 4
      %s67 = int_to_ptr.vmem [resolvable:$true] %s66
      %72 = dma.hbm_to_vmem [thread:$0]  %s5, 2048, %s67, [#allocation9], 128, 128, 8
    $region25: #{tpu_custom_call.1} parent=1 // pred_fallthru
      _
    // Predicated region
    $region26: #{tpu_custom_call.1} parent=1 // pred_check
      _
    $region27: #{tpu_custom_call.1} parent=1 // pred_check_branch
      %74 = sbr.rel (0) target = $region29
    $region28: #{tpu_custom_call.1} parent=1 // pred_region
      _
    $region29: #{tpu_custom_call.1} parent=1 // pred_fallthru
      _
    // Predicated region
    $region30: #{tpu_custom_call.1} parent=1 // pred_check
      _
    $region31: #{tpu_custom_call.1} parent=1 // pred_check_branch
      %76 = sbr.rel (0) target = $region33
    $region32: #{tpu_custom_call.1} parent=1 // pred_region
      %s78 = ssub.s32 2048, 2048
      %79 = vsyncadd [#allocation9], %s78
      %s80 = sshll.u32 [#allocation10], 4
      %s81 = int_to_ptr.vmem [resolvable:$true] %s80
      %86 = dma.hbm_to_vmem [thread:$0]  %s7, 2048, %s81, [#allocation9], 128, 128, 8
    $region33: #{tpu_custom_call.1} parent=1 // pred_fallthru
      _
    // Predicated region
    $region34: #{tpu_custom_call.1} parent=1 // pred_check
      _
    $region35: #{tpu_custom_call.1} parent=1 // pred_check_branch
      %88 = sbr.rel (0) target = $region37
    $region36: #{tpu_custom_call.1} parent=1 // pred_region
      _
    $region37: #{tpu_custom_call.1} parent=1 // pred_fallthru
      _
    // Predicated region
    $region38: #{tpu_custom_call.1} parent=1 // pred_check
      _
    $region39: #{tpu_custom_call.1} parent=1 // pred_check_branch
      %90 = sbr.rel (0) target = $region41
    $region40: #{tpu_custom_call.1} parent=1 // pred_region
      %s92 = ssub.s32 2048, 2048
      %93 = vsyncadd [#allocation12], %s92
      %s94 = sshll.u32 [#allocation11], 4
      %s95 = int_to_ptr.vmem [resolvable:$true] %s94
      %100 = dma.hbm_to_vmem [thread:$0]  %s9, 2048, %s95, [#allocation12], 128, 128, 8
    $region41: #{tpu_custom_call.1} parent=1 // pred_fallthru
      _
    // Predicated region
    $region42: #{tpu_custom_call.1} parent=1 // pred_check
      _
    $region43: #{tpu_custom_call.1} parent=1 // pred_check_branch
      %102 = sbr.rel (0) target = $region45
    $region44: #{tpu_custom_call.1} parent=1 // pred_region
      _
    $region45: #{tpu_custom_call.1} parent=1 // pred_fallthru
      _
    // Predicated region
    $region46: #{tpu_custom_call.1} parent=1 // pred_check
      _
    $region47: #{tpu_custom_call.1} parent=1 // pred_check_branch
      %104 = sbr.rel (0) target = $region49
    $region48: #{tpu_custom_call.1} parent=1 // pred_region
      %105 = dma.done [#allocation3], 256
    $region49: #{tpu_custom_call.1} parent=1 // pred_fallthru
      _
    // Predicated region
    $region50: #{tpu_custom_call.1} parent=1 // pred_check
      _
    $region51: #{tpu_custom_call.1} parent=1 // pred_check_branch
      %107 = sbr.rel (0) target = $region53
    $region52: #{tpu_custom_call.1} parent=1 // pred_region
      %108 = dma.done [#allocation6], 2048
    $region53: #{tpu_custom_call.1} parent=1 // pred_fallthru
      _
    // Predicated region
    $region54: #{tpu_custom_call.1} parent=1 // pred_check
      _
    $region55: #{tpu_custom_call.1} parent=1 // pred_check_branch
      %110 = sbr.rel (0) target = $region57
    $region56: #{tpu_custom_call.1} parent=1 // pred_region
      %111 = dma.done [#allocation6], 2048
    $region57: #{tpu_custom_call.1} parent=1 // pred_fallthru
      _
    // Predicated region
    $region58: #{tpu_custom_call.1} parent=1 // pred_check
      _
    $region59: #{tpu_custom_call.1} parent=1 // pred_check_branch
      %113 = sbr.rel (0) target = $region61
    $region60: #{tpu_custom_call.1} parent=1 // pred_region
      %114 = dma.done [#allocation9], 2048
    $region61: #{tpu_custom_call.1} parent=1 // pred_fallthru
      _
    // Predicated region
    $region62: #{tpu_custom_call.1} parent=1 // pred_check
      _
    $region63: #{tpu_custom_call.1} parent=1 // pred_check_branch
      %116 = sbr.rel (0) target = $region65
    $region64: #{tpu_custom_call.1} parent=1 // pred_region
      %117 = dma.done [#allocation9], 2048
    $region65: #{tpu_custom_call.1} parent=1 // pred_fallthru
      _
    // Predicated region
    $region66: #{tpu_custom_call.1} parent=1 // pred_check
      _
    $region67: #{tpu_custom_call.1} parent=1 // pred_check_branch
      %119 = sbr.rel (0) target = $region69
    $region68: #{tpu_custom_call.1} parent=1 // pred_region
      %120 = dma.done [#allocation12], 2048
    $region69: #{tpu_custom_call.1} parent=1 // pred_fallthru
      _
    %v121 = vld [vmem:[#allocation2] sm:$0xff]
    %v122 = vld [vmem:[#allocation2 + $0x8] sm:$0xff]
    %v123 = vld [vmem:[#allocation5] sm:$0xff]
    %v124 = vld [vmem:[#allocation5 + $0x8] sm:$0xff]
    %v125 = vld [vmem:[#allocation5 + $0x10] sm:$0xff]
    %v126 = vld [vmem:[#allocation5 + $0x18] sm:$0xff]
    %v127 = vld [vmem:[#allocation5 + $0x20] sm:$0xff]
    %v128 = vld [vmem:[#allocation5 + $0x28] sm:$0xff]
    %v129 = vld [vmem:[#allocation5 + $0x30] sm:$0xff]
    %v130 = vld [vmem:[#allocation5 + $0x38] sm:$0xff]
    %v131 = vld [vmem:[#allocation5 + $0x40] sm:$0xff]
    %v132 = vld [vmem:[#allocation5 + $0x48] sm:$0xff]
    %v133 = vld [vmem:[#allocation5 + $0x50] sm:$0xff]
    %v134 = vld [vmem:[#allocation5 + $0x58] sm:$0xff]
    %v135 = vld [vmem:[#allocation5 + $0x60] sm:$0xff]
    %v136 = vld [vmem:[#allocation5 + $0x68] sm:$0xff]
    %v137 = vld [vmem:[#allocation5 + $0x70] sm:$0xff]
    %v138 = vld [vmem:[#allocation5 + $0x78] sm:$0xff]
    %v139 = vld [vmem:[%s2] sm:$0x1]
    %v141 = vlaneseq
    %v142 = vshrl.u32 %v141, 7
    %v143 = vsub.s32 0, %v142
    %v144 = vrot.slane %v139, %v143
    %146 = vmatprep.subr.mxu0 0.0
    %147 = vmatpush1.msra.mxu0 %v138
    %148 = vmatprep.subr.mxu0 0.0
    %149 = vmatpush1.msra.mxu0 %v137
    %150 = vmatprep.subr.mxu0 0.0
    %151 = vmatpush1.msra.mxu0 %v136
    %152 = vmatprep.subr.mxu0 0.0
    %153 = vmatpush1.msra.mxu0 %v135
    %154 = vmatprep.subr.mxu0 0.0
    %155 = vmatpush1.msra.mxu0 %v134
    %156 = vmatprep.subr.mxu0 0.0
    %157 = vmatpush1.msra.mxu0 %v133
    %158 = vmatprep.subr.mxu0 0.0
    %159 = vmatpush1.msra.mxu0 %v132
    %160 = vmatprep.subr.mxu0 0.0
    %161 = vmatpush1.msra.mxu0 %v131
    %162 = vmatprep.subr.mxu0 0.0
    %163 = vmatpush1.msra.mxu0 %v130
    %164 = vmatprep.subr.mxu0 0.0
    %165 = vmatpush1.msra.mxu0 %v129
    %166 = vmatprep.subr.mxu0 0.0
    %167 = vmatpush1.msra.mxu0 %v128
    %168 = vmatprep.subr.mxu0 0.0
    %169 = vmatpush1.msra.mxu0 %v127
    %170 = vmatprep.subr.mxu0 0.0
    %171 = vmatpush1.msra.mxu0 %v126
    %172 = vmatprep.subr.mxu0 0.0
    %173 = vmatpush1.msra.mxu0 %v125
    %174 = vmatprep.subr.mxu0 0.0
    %175 = vmatpush1.msra.mxu0 %v124
    %176 = vmatprep.subr.mxu0 0.0
    %177 = vmatpush1.msra.mxu0 %v123
    %178 = vmatprep.subr.mxu0 0.0
    %179 = vmatpush2.msra.mxu0 0.0
    %180 = vmatprep.subr.mxu0 0.0
    %181 = vmatpush2.msra.mxu0 0.0
    %182 = vmatprep.subr.mxu0 0.0
    %183 = vmatpush2.msra.mxu0 0.0
    %184 = vmatprep.subr.mxu0 0.0
    %185 = vmatpush2.msra.mxu0 0.0
    %186 = vmatprep.subr.mxu0 0.0
    %187 = vmatpush2.msra.mxu0 0.0
    %188 = vmatprep.subr.mxu0 0.0
    %189 = vmatpush2.msra.mxu0 0.0
    %190 = vmatprep.subr.mxu0 0.0
    %191 = vmatpush2.msra.mxu0 0.0
    %192 = vmatprep.subr.mxu0 0.0
    %193 = vmatpush2.msra.mxu0 0.0
    %194 = vmatprep.subr.mxu0 0.0
    %195 = vmatpush2.msra.mxu0 0.0
    %196 = vmatprep.subr.mxu0 0.0
    %197 = vmatpush2.msra.mxu0 0.0
    %198 = vmatprep.subr.mxu0 0.0
    %199 = vmatpush2.msra.mxu0 0.0
    %200 = vmatprep.subr.mxu0 0.0
    %201 = vmatpush2.msra.mxu0 0.0
    %202 = vmatprep.subr.mxu0 0.0
    %203 = vmatpush2.msra.mxu0 0.0
    %204 = vmatprep.subr.mxu0 0.0
    %205 = vmatpush2.msra.mxu0 0.0
    %206 = vmatprep.subr.mxu0 0.0
    %207 = vmatpush2.msra.mxu0 0.0
    %208 = vmatprep.subr.mxu0 0.0
    %209 = vmatpush2.msra.mxu0 0.0
    %210 = vmatprep.mubr.f32.mxu0 0.0
    %211 = vmatmul.mubr.f32.gmra.mxu0 %v121
    %v212 = vpop.f32.mrf.mxu0
    %v213 = vadd.f32 %v144, %v212
    %v214 = vpop.f32.mrf.mxu0
    %215 = vmatprep.mubr.f32.mxu0 0.0
    %216 = vmatmul.mubr.f32.gmra.mxu0 %v122
    %v217 = vpop.f32.mrf.mxu0
    %v218 = vadd.f32 %v144, %v217
    %v219 = vpop.f32.mrf.mxu0
    %220 = vdwg.mxu0
    %v221 = vmax.f32 %v213, 0.0
    %v222 = vmax.f32 %v218, 0.0
    %v223 = vld [vmem:[#allocation7] sm:$0xff]
    %v224 = vld [vmem:[#allocation7 + $0x8] sm:$0xff]
    %v225 = vld [vmem:[#allocation7 + $0x10] sm:$0xff]
    %v226 = vld [vmem:[#allocation7 + $0x18] sm:$0xff]
    %v227 = vld [vmem:[#allocation7 + $0x20] sm:$0xff]
    %v228 = vld [vmem:[#allocation7 + $0x28] sm:$0xff]
    %v229 = vld [vmem:[#allocation7 + $0x30] sm:$0xff]
    %v230 = vld [vmem:[#allocation7 + $0x38] sm:$0xff]
    %v231 = vld [vmem:[#allocation7 + $0x40] sm:$0xff]
    %v232 = vld [vmem:[#allocation7 + $0x48] sm:$0xff]
    %v233 = vld [vmem:[#allocation7 + $0x50] sm:$0xff]
    %v234 = vld [vmem:[#allocation7 + $0x58] sm:$0xff]
    %v235 = vld [vmem:[#allocation7 + $0x60] sm:$0xff]
    %v236 = vld [vmem:[#allocation7 + $0x68] sm:$0xff]
    %v237 = vld [vmem:[#allocation7 + $0x70] sm:$0xff]
    %v238 = vld [vmem:[#allocation7 + $0x78] sm:$0xff]
    %v239 = vld [vmem:[%s4] sm:$0x1]
    %v241 = vlaneseq
    %v242 = vshrl.u32 %v241, 7
    %v243 = vsub.s32 0, %v242
    %v244 = vrot.slane %v239, %v243
    %246 = vmatprep.subr.mxu0 0.0
    %247 = vmatpush1.msra.mxu0 %v238
    %248 = vmatprep.subr.mxu0 0.0
    %249 = vmatpush1.msra.mxu0 %v237
    %250 = vmatprep.subr.mxu0 0.0
    %251 = vmatpush1.msra.mxu0 %v236
    %252 = vmatprep.subr.mxu0 0.0
    %253 = vmatpush1.msra.mxu0 %v235
    %254 = vmatprep.subr.mxu0 0.0
    %255 = vmatpush1.msra.mxu0 %v234
    %256 = vmatprep.subr.mxu0 0.0
    %257 = vmatpush1.msra.mxu0 %v233
    %258 = vmatprep.subr.mxu0 0.0
    %259 = vmatpush1.msra.mxu0 %v232
    %260 = vmatprep.subr.mxu0 0.0
    %261 = vmatpush1.msra.mxu0 %v231
    %262 = vmatprep.subr.mxu0 0.0
    %263 = vmatpush1.msra.mxu0 %v230
    %264 = vmatprep.subr.mxu0 0.0
    %265 = vmatpush1.msra.mxu0 %v229
    %266 = vmatprep.subr.mxu0 0.0
    %267 = vmatpush1.msra.mxu0 %v228
    %268 = vmatprep.subr.mxu0 0.0
    %269 = vmatpush1.msra.mxu0 %v227
    %270 = vmatprep.subr.mxu0 0.0
    %271 = vmatpush1.msra.mxu0 %v226
    %272 = vmatprep.subr.mxu0 0.0
    %273 = vmatpush1.msra.mxu0 %v225
    %274 = vmatprep.subr.mxu0 0.0
    %275 = vmatpush1.msra.mxu0 %v224
    %276 = vmatprep.subr.mxu0 0.0
    %277 = vmatpush1.msra.mxu0 %v223
    %278 = vmatprep.subr.mxu0 0.0
    %279 = vmatpush2.msra.mxu0 0.0
    %280 = vmatprep.subr.mxu0 0.0
    %281 = vmatpush2.msra.mxu0 0.0
    %282 = vmatprep.subr.mxu0 0.0
    %283 = vmatpush2.msra.mxu0 0.0
    %284 = vmatprep.subr.mxu0 0.0
    %285 = vmatpush2.msra.mxu0 0.0
    %286 = vmatprep.subr.mxu0 0.0
    %287 = vmatpush2.msra.mxu0 0.0
    %288 = vmatprep.subr.mxu0 0.0
    %289 = vmatpush2.msra.mxu0 0.0
    %290 = vmatprep.subr.mxu0 0.0
    %291 = vmatpush2.msra.mxu0 0.0
    %292 = vmatprep.subr.mxu0 0.0
    %293 = vmatpush2.msra.mxu0 0.0
    %294 = vmatprep.subr.mxu0 0.0
    %295 = vmatpush2.msra.mxu0 0.0
    %296 = vmatprep.subr.mxu0 0.0
    %297 = vmatpush2.msra.mxu0 0.0
    %298 = vmatprep.subr.mxu0 0.0
    %299 = vmatpush2.msra.mxu0 0.0
    %300 = vmatprep.subr.mxu0 0.0
    %301 = vmatpush2.msra.mxu0 0.0
    %302 = vmatprep.subr.mxu0 0.0
    %303 = vmatpush2.msra.mxu0 0.0
    %304 = vmatprep.subr.mxu0 0.0
    %305 = vmatpush2.msra.mxu0 0.0
    %306 = vmatprep.subr.mxu0 0.0
    %307 = vmatpush2.msra.mxu0 0.0
    %308 = vmatprep.subr.mxu0 0.0
    %309 = vmatpush2.msra.mxu0 0.0
    %310 = vmatprep.mubr.f32.mxu0 0.0
    %311 = vmatmul.mubr.f32.gmra.mxu0 %v221
    %v312 = vpop.f32.mrf.mxu0
    %v313 = vadd.f32 %v244, %v312
    %v314 = vpop.f32.mrf.mxu0
    %315 = vmatprep.mubr.f32.mxu0 0.0
    %316 = vmatmul.mubr.f32.gmra.mxu0 %v222
    %v317 = vpop.f32.mrf.mxu0
    %v318 = vadd.f32 %v244, %v317
    %v319 = vpop.f32.mrf.mxu0
    %320 = vdwg.mxu0
    %v321 = vmax.f32 %v313, 0.0
    %v322 = vmax.f32 %v318, 0.0
    %v323 = vld [vmem:[#allocation8] sm:$0xff]
    %v324 = vld [vmem:[#allocation8 + $0x8] sm:$0xff]
    %v325 = vld [vmem:[#allocation8 + $0x10] sm:$0xff]
    %v326 = vld [vmem:[#allocation8 + $0x18] sm:$0xff]
    %v327 = vld [vmem:[#allocation8 + $0x20] sm:$0xff]
    %v328 = vld [vmem:[#allocation8 + $0x28] sm:$0xff]
    %v329 = vld [vmem:[#allocation8 + $0x30] sm:$0xff]
    %v330 = vld [vmem:[#allocation8 + $0x38] sm:$0xff]
    %v331 = vld [vmem:[#allocation8 + $0x40] sm:$0xff]
    %v332 = vld [vmem:[#allocation8 + $0x48] sm:$0xff]
    %v333 = vld [vmem:[#allocation8 + $0x50] sm:$0xff]
    %v334 = vld [vmem:[#allocation8 + $0x58] sm:$0xff]
    %v335 = vld [vmem:[#allocation8 + $0x60] sm:$0xff]
    %v336 = vld [vmem:[#allocation8 + $0x68] sm:$0xff]
    %v337 = vld [vmem:[#allocation8 + $0x70] sm:$0xff]
    %v338 = vld [vmem:[#allocation8 + $0x78] sm:$0xff]
    %v339 = vld [vmem:[%s6] sm:$0x1]
    %v341 = vlaneseq
    %v342 = vshrl.u32 %v341, 7
    %v343 = vsub.s32 0, %v342
    %v344 = vrot.slane %v339, %v343
    %346 = vmatprep.subr.mxu0 0.0
    %347 = vmatpush1.msra.mxu0 %v338
    %348 = vmatprep.subr.mxu0 0.0
    %349 = vmatpush1.msra.mxu0 %v337
    %350 = vmatprep.subr.mxu0 0.0
    %351 = vmatpush1.msra.mxu0 %v336
    %352 = vmatprep.subr.mxu0 0.0
    %353 = vmatpush1.msra.mxu0 %v335
    %354 = vmatprep.subr.mxu0 0.0
    %355 = vmatpush1.msra.mxu0 %v334
    %356 = vmatprep.subr.mxu0 0.0
    %357 = vmatpush1.msra.mxu0 %v333
    %358 = vmatprep.subr.mxu0 0.0
    %359 = vmatpush1.msra.mxu0 %v332
    %360 = vmatprep.subr.mxu0 0.0
    %361 = vmatpush1.msra.mxu0 %v331
    %362 = vmatprep.subr.mxu0 0.0
    %363 = vmatpush1.msra.mxu0 %v330
    %364 = vmatprep.subr.mxu0 0.0
    %365 = vmatpush1.msra.mxu0 %v329
    %366 = vmatprep.subr.mxu0 0.0
    %367 = vmatpush1.msra.mxu0 %v328
    %368 = vmatprep.subr.mxu0 0.0
    %369 = vmatpush1.msra.mxu0 %v327
    %370 = vmatprep.subr.mxu0 0.0
    %371 = vmatpush1.msra.mxu0 %v326
    %372 = vmatprep.subr.mxu0 0.0
    %373 = vmatpush1.msra.mxu0 %v325
    %374 = vmatprep.subr.mxu0 0.0
    %375 = vmatpush1.msra.mxu0 %v324
    %376 = vmatprep.subr.mxu0 0.0
    %377 = vmatpush1.msra.mxu0 %v323
    %378 = vmatprep.subr.mxu0 0.0
    %379 = vmatpush2.msra.mxu0 0.0
    %380 = vmatprep.subr.mxu0 0.0
    %381 = vmatpush2.msra.mxu0 0.0
    %382 = vmatprep.subr.mxu0 0.0
    %383 = vmatpush2.msra.mxu0 0.0
    %384 = vmatprep.subr.mxu0 0.0
    %385 = vmatpush2.msra.mxu0 0.0
    %386 = vmatprep.subr.mxu0 0.0
    %387 = vmatpush2.msra.mxu0 0.0
    %388 = vmatprep.subr.mxu0 0.0
    %389 = vmatpush2.msra.mxu0 0.0
    %390 = vmatprep.subr.mxu0 0.0
    %391 = vmatpush2.msra.mxu0 0.0
    %392 = vmatprep.subr.mxu0 0.0
    %393 = vmatpush2.msra.mxu0 0.0
    %394 = vmatprep.subr.mxu0 0.0
    %395 = vmatpush2.msra.mxu0 0.0
    %396 = vmatprep.subr.mxu0 0.0
    %397 = vmatpush2.msra.mxu0 0.0
    %398 = vmatprep.subr.mxu0 0.0
    %399 = vmatpush2.msra.mxu0 0.0
    %400 = vmatprep.subr.mxu0 0.0
    %401 = vmatpush2.msra.mxu0 0.0
    %402 = vmatprep.subr.mxu0 0.0
    %403 = vmatpush2.msra.mxu0 0.0
    %404 = vmatprep.subr.mxu0 0.0
    %405 = vmatpush2.msra.mxu0 0.0
    %406 = vmatprep.subr.mxu0 0.0
    %407 = vmatpush2.msra.mxu0 0.0
    %408 = vmatprep.subr.mxu0 0.0
    %409 = vmatpush2.msra.mxu0 0.0
    %410 = vmatprep.mubr.f32.mxu0 0.0
    %411 = vmatmul.mubr.f32.gmra.mxu0 %v321
    %v412 = vpop.f32.mrf.mxu0
    %v413 = vadd.f32 %v344, %v412
    %v414 = vpop.f32.mrf.mxu0
    %415 = vmatprep.mubr.f32.mxu0 0.0
    %416 = vmatmul.mubr.f32.gmra.mxu0 %v322
    %v417 = vpop.f32.mrf.mxu0
    %v418 = vadd.f32 %v344, %v417
    %v419 = vpop.f32.mrf.mxu0
    %420 = vdwg.mxu0
    %v421 = vmax.f32 %v413, 0.0
    %v422 = vmax.f32 %v418, 0.0
    %v423 = vld [vmem:[#allocation10] sm:$0xff]
    %v424 = vld [vmem:[#allocation10 + $0x8] sm:$0xff]
    %v425 = vld [vmem:[#allocation10 + $0x10] sm:$0xff]
    %v426 = vld [vmem:[#allocation10 + $0x18] sm:$0xff]
    %v427 = vld [vmem:[#allocation10 + $0x20] sm:$0xff]
    %v428 = vld [vmem:[#allocation10 + $0x28] sm:$0xff]
    %v429 = vld [vmem:[#allocation10 + $0x30] sm:$0xff]
    %v430 = vld [vmem:[#allocation10 + $0x38] sm:$0xff]
    %v431 = vld [vmem:[#allocation10 + $0x40] sm:$0xff]
    %v432 = vld [vmem:[#allocation10 + $0x48] sm:$0xff]
    %v433 = vld [vmem:[#allocation10 + $0x50] sm:$0xff]
    %v434 = vld [vmem:[#allocation10 + $0x58] sm:$0xff]
    %v435 = vld [vmem:[#allocation10 + $0x60] sm:$0xff]
    %v436 = vld [vmem:[#allocation10 + $0x68] sm:$0xff]
    %v437 = vld [vmem:[#allocation10 + $0x70] sm:$0xff]
    %v438 = vld [vmem:[#allocation10 + $0x78] sm:$0xff]
    %v439 = vld [vmem:[%s8] sm:$0x1]
    %v441 = vlaneseq
    %v442 = vshrl.u32 %v441, 7
    %v443 = vsub.s32 0, %v442
    %v444 = vrot.slane %v439, %v443
    %446 = vmatprep.subr.mxu0 0.0
    %447 = vmatpush1.msra.mxu0 %v438
    %448 = vmatprep.subr.mxu0 0.0
    %449 = vmatpush1.msra.mxu0 %v437
    %450 = vmatprep.subr.mxu0 0.0
    %451 = vmatpush1.msra.mxu0 %v436
    %452 = vmatprep.subr.mxu0 0.0
    %453 = vmatpush1.msra.mxu0 %v435
    %454 = vmatprep.subr.mxu0 0.0
    %455 = vmatpush1.msra.mxu0 %v434
    %456 = vmatprep.subr.mxu0 0.0
    %457 = vmatpush1.msra.mxu0 %v433
    %458 = vmatprep.subr.mxu0 0.0
    %459 = vmatpush1.msra.mxu0 %v432
    %460 = vmatprep.subr.mxu0 0.0
    %461 = vmatpush1.msra.mxu0 %v431
    %462 = vmatprep.subr.mxu0 0.0
    %463 = vmatpush1.msra.mxu0 %v430
    %464 = vmatprep.subr.mxu0 0.0
    %465 = vmatpush1.msra.mxu0 %v429
    %466 = vmatprep.subr.mxu0 0.0
    %467 = vmatpush1.msra.mxu0 %v428
    %468 = vmatprep.subr.mxu0 0.0
    %469 = vmatpush1.msra.mxu0 %v427
    %470 = vmatprep.subr.mxu0 0.0
    %471 = vmatpush1.msra.mxu0 %v426
    %472 = vmatprep.subr.mxu0 0.0
    %473 = vmatpush1.msra.mxu0 %v425
    %474 = vmatprep.subr.mxu0 0.0
    %475 = vmatpush1.msra.mxu0 %v424
    %476 = vmatprep.subr.mxu0 0.0
    %477 = vmatpush1.msra.mxu0 %v423
    %478 = vmatprep.subr.mxu0 0.0
    %479 = vmatpush2.msra.mxu0 0.0
    %480 = vmatprep.subr.mxu0 0.0
    %481 = vmatpush2.msra.mxu0 0.0
    %482 = vmatprep.subr.mxu0 0.0
    %483 = vmatpush2.msra.mxu0 0.0
    %484 = vmatprep.subr.mxu0 0.0
    %485 = vmatpush2.msra.mxu0 0.0
    %486 = vmatprep.subr.mxu0 0.0
    %487 = vmatpush2.msra.mxu0 0.0
    %488 = vmatprep.subr.mxu0 0.0
    %489 = vmatpush2.msra.mxu0 0.0
    %490 = vmatprep.subr.mxu0 0.0
    %491 = vmatpush2.msra.mxu0 0.0
    %492 = vmatprep.subr.mxu0 0.0
    %493 = vmatpush2.msra.mxu0 0.0
    %494 = vmatprep.subr.mxu0 0.0
    %495 = vmatpush2.msra.mxu0 0.0
    %496 = vmatprep.subr.mxu0 0.0
    %497 = vmatpush2.msra.mxu0 0.0
    %498 = vmatprep.subr.mxu0 0.0
    %499 = vmatpush2.msra.mxu0 0.0
    %500 = vmatprep.subr.mxu0 0.0
    %501 = vmatpush2.msra.mxu0 0.0
    %502 = vmatprep.subr.mxu0 0.0
    %503 = vmatpush2.msra.mxu0 0.0
    %504 = vmatprep.subr.mxu0 0.0
    %505 = vmatpush2.msra.mxu0 0.0
    %506 = vmatprep.subr.mxu0 0.0
    %507 = vmatpush2.msra.mxu0 0.0
    %508 = vmatprep.subr.mxu0 0.0
    %509 = vmatpush2.msra.mxu0 0.0
    %510 = vmatprep.mubr.f32.mxu0 0.0
    %511 = vmatmul.mubr.f32.gmra.mxu0 %v421
    %v512 = vpop.f32.mrf.mxu0
    %v513 = vadd.f32 %v444, %v512
    %v514 = vpop.f32.mrf.mxu0
    %515 = vmatprep.mubr.f32.mxu0 0.0
    %516 = vmatmul.mubr.f32.gmra.mxu0 %v422
    %v517 = vpop.f32.mrf.mxu0
    %v518 = vadd.f32 %v444, %v517
    %v519 = vpop.f32.mrf.mxu0
    %520 = vdwg.mxu0
    %v521 = vmax.f32 %v513, 0.0
    %v522 = vmax.f32 %v518, 0.0
    %v523 = vld [vmem:[#allocation11] sm:$0xff]
    %v524 = vld [vmem:[#allocation11 + $0x8] sm:$0xff]
    %v525 = vld [vmem:[#allocation11 + $0x10] sm:$0xff]
    %v526 = vld [vmem:[#allocation11 + $0x18] sm:$0xff]
    %v527 = vld [vmem:[#allocation11 + $0x20] sm:$0xff]
    %v528 = vld [vmem:[#allocation11 + $0x28] sm:$0xff]
    %v529 = vld [vmem:[#allocation11 + $0x30] sm:$0xff]
    %v530 = vld [vmem:[#allocation11 + $0x38] sm:$0xff]
    %v531 = vld [vmem:[#allocation11 + $0x40] sm:$0xff]
    %v532 = vld [vmem:[#allocation11 + $0x48] sm:$0xff]
    %v533 = vld [vmem:[#allocation11 + $0x50] sm:$0xff]
    %v534 = vld [vmem:[#allocation11 + $0x58] sm:$0xff]
    %v535 = vld [vmem:[#allocation11 + $0x60] sm:$0xff]
    %v536 = vld [vmem:[#allocation11 + $0x68] sm:$0xff]
    %v537 = vld [vmem:[#allocation11 + $0x70] sm:$0xff]
    %v538 = vld [vmem:[#allocation11 + $0x78] sm:$0xff]
    %v539 = vld [vmem:[%s10] sm:$0x1]
    %v541 = vlaneseq
    %v542 = vshrl.u32 %v541, 7
    %v543 = vsub.s32 0, %v542
    %v544 = vrot.slane %v539, %v543
    %546 = vmatprep.subr.mxu0 0.0
    %547 = vmatpush1.msra.mxu0 %v538
    %548 = vmatprep.subr.mxu0 0.0
    %549 = vmatpush1.msra.mxu0 %v537
    %550 = vmatprep.subr.mxu0 0.0
    %551 = vmatpush1.msra.mxu0 %v536
    %552 = vmatprep.subr.mxu0 0.0
    %553 = vmatpush1.msra.mxu0 %v535
    %554 = vmatprep.subr.mxu0 0.0
    %555 = vmatpush1.msra.mxu0 %v534
    %556 = vmatprep.subr.mxu0 0.0
    %557 = vmatpush1.msra.mxu0 %v533
    %558 = vmatprep.subr.mxu0 0.0
    %559 = vmatpush1.msra.mxu0 %v532
    %560 = vmatprep.subr.mxu0 0.0
    %561 = vmatpush1.msra.mxu0 %v531
    %562 = vmatprep.subr.mxu0 0.0
    %563 = vmatpush1.msra.mxu0 %v530
    %564 = vmatprep.subr.mxu0 0.0
    %565 = vmatpush1.msra.mxu0 %v529
    %566 = vmatprep.subr.mxu0 0.0
    %567 = vmatpush1.msra.mxu0 %v528
    %568 = vmatprep.subr.mxu0 0.0
    %569 = vmatpush1.msra.mxu0 %v527
    %570 = vmatprep.subr.mxu0 0.0
    %571 = vmatpush1.msra.mxu0 %v526
    %572 = vmatprep.subr.mxu0 0.0
    %573 = vmatpush1.msra.mxu0 %v525
    %574 = vmatprep.subr.mxu0 0.0
    %575 = vmatpush1.msra.mxu0 %v524
    %576 = vmatprep.subr.mxu0 0.0
    %577 = vmatpush1.msra.mxu0 %v523
    %578 = vmatprep.subr.mxu0 0.0
    %579 = vmatpush2.msra.mxu0 0.0
    %580 = vmatprep.subr.mxu0 0.0
    %581 = vmatpush2.msra.mxu0 0.0
    %582 = vmatprep.subr.mxu0 0.0
    %583 = vmatpush2.msra.mxu0 0.0
    %584 = vmatprep.subr.mxu0 0.0
    %585 = vmatpush2.msra.mxu0 0.0
    %586 = vmatprep.subr.mxu0 0.0
    %587 = vmatpush2.msra.mxu0 0.0
    %588 = vmatprep.subr.mxu0 0.0
    %589 = vmatpush2.msra.mxu0 0.0
    %590 = vmatprep.subr.mxu0 0.0
    %591 = vmatpush2.msra.mxu0 0.0
    %592 = vmatprep.subr.mxu0 0.0
    %593 = vmatpush2.msra.mxu0 0.0
    %594 = vmatprep.subr.mxu0 0.0
    %595 = vmatpush2.msra.mxu0 0.0
    %596 = vmatprep.subr.mxu0 0.0
    %597 = vmatpush2.msra.mxu0 0.0
    %598 = vmatprep.subr.mxu0 0.0
    %599 = vmatpush2.msra.mxu0 0.0
    %600 = vmatprep.subr.mxu0 0.0
    %601 = vmatpush2.msra.mxu0 0.0
    %602 = vmatprep.subr.mxu0 0.0
    %603 = vmatpush2.msra.mxu0 0.0
    %604 = vmatprep.subr.mxu0 0.0
    %605 = vmatpush2.msra.mxu0 0.0
    %606 = vmatprep.subr.mxu0 0.0
    %607 = vmatpush2.msra.mxu0 0.0
    %608 = vmatprep.subr.mxu0 0.0
    %609 = vmatpush2.msra.mxu0 0.0
    %610 = vmatprep.mubr.f32.mxu0 0.0
    %611 = vmatmul.mubr.f32.gmra.mxu0 %v521
    %v612 = vpop.f32.mrf.mxu0
    %v613 = vadd.f32 %v544, %v612
    %v614 = vpop.f32.mrf.mxu0
    %615 = vmatprep.mubr.f32.mxu0 0.0
    %616 = vmatmul.mubr.f32.gmra.mxu0 %v522
    %v617 = vpop.f32.mrf.mxu0
    %v618 = vadd.f32 %v544, %v617
    %v619 = vpop.f32.mrf.mxu0
    %620 = vdwg.mxu0
    %621 = vst [vmem:[#allocation13] sm:$0xff] %v613
    %622 = vst [vmem:[#allocation13 + $0x8] sm:$0xff] %v618
    // Predicated region
    $region70: #{tpu_custom_call.1} parent=1 // pred_check
      _
    $region71: #{tpu_custom_call.1} parent=1 // pred_check_branch
      %624 = sbr.rel (0) target = $region73
    $region72: #{tpu_custom_call.1} parent=1 // pred_region
      %s626 = ssub.s32 256, 256
      %627 = vsyncadd [#allocation4], %s626
      %s628 = sshll.u32 [#allocation13], 4
      %s629 = int_to_ptr.vmem [resolvable:$true] %s628
      %634 = dma.vmem_to_hbm [thread:$0]  %s629, 256, %s11, [#allocation4], 128, 128, 8
    $region73: #{tpu_custom_call.1} parent=1 // pred_fallthru
      _
    // Predicated region
    $region74: #{tpu_custom_call.1} parent=1 // pred_check
      _
    $region75: #{tpu_custom_call.1} parent=1 // pred_check_branch
      %636 = sbr.rel (0) target = $region77
    $region76: #{tpu_custom_call.1} parent=1 // pred_region
      %637 = dma.done [#allocation4], 256
    $region77: #{tpu_custom_call.1} parent=1 // pred_fallthru
      _
    %638 = vsyncpa [#allocation3], 1
    %639 = vsyncpa [#allocation6], 1
    %640 = vsyncpa [#allocation9], 1
    %641 = vsyncpa [#allocation12], 1
    %642 = vsyncpa [#allocation4], 1

</llo_original>
